<compile_context>
chip_gen: v7x
topology: tpu7x:2x2x1
jax: 0.10.0
libtpu: 0.0.40
codegen_flags: <defaults>
</compile_context>

<pallas_src>
import jax
import jax.numpy as jnp
from jax.experimental import pallas as pl
from jax.experimental.pallas import tpu as pltpu

LANES = 128            # lane width of a vreg / unmasked-store target
DEFAULT_TM = 4096      # rows per tile: (4096, 128) f32 = 2 MiB tile
MIN_GRID_STEPS = 4     # keep >= 4 steps so pipelining + v7x dual-TC both engage

# Sublane pack per element size: f32 -> 8, bf16/f16 -> 16, int8/fp8 -> 32.
_SUBLANE_PACK = {4: 8, 2: 16, 1: 32}


def linear_kernel(w_ref, b_ref, x_ref, o_ref):
    # w_ref: SMEM (1,) f32   -- nn.Linear(1,1).weight flattened
    # b_ref: SMEM (1,) f32   -- nn.Linear(1,1).bias
    # x_ref: VMEM (tm, 128)  -- lane-dense slab of inputs
    # o_ref: VMEM (tm, 128)
    w = w_ref[0]
    b = b_ref[0]
    y = x_ref[...].astype(jnp.float32) * w + b
    o_ref[...] = y.astype(o_ref.dtype)


def _choose_tm(M, dtype, tm_max):
    """Pick a row-tile: dtype-packed, <= tm_max, and >= MIN_GRID_STEPS steps
    whenever there are enough rows; tiny inputs use one full-extent block."""
    pack = _SUBLANE_PACK.get(jnp.dtype(dtype).itemsize, 8)
    if M >= MIN_GRID_STEPS * pack:
        tm = min(tm_max, M // MIN_GRID_STEPS)
        tm = max(pack, (tm // pack) * pack)
        return tm
    # Tiny input: a single block equal to the full row extent is always a
    # legal block shape and avoids any masking.
    return M


def _linear_slab(x2, w_flat, b_flat, tm_max):
    """Run the FMA kernel over a lane-dense (M, 128) slab."""
    M, L = x2.shape
    dtype = x2.dtype
    tm = _choose_tm(M, dtype, tm_max)
    grid = (pl.cdiv(M, tm),)          # ragged last block handled by Pallas

    itemsize = jnp.dtype(dtype).itemsize
    cost = pl.CostEstimate(
        flops=2 * M * L,
        transcendentals=0,
        bytes_accessed=2 * M * L * itemsize,
    )

    return pl.pallas_call(
        linear_kernel,
        out_shape=jax.ShapeDtypeStruct((M, L), dtype),
        grid=grid,
        in_specs=[
            pl.BlockSpec(memory_space=pltpu.MemorySpace.SMEM),   # weight scalar
            pl.BlockSpec(memory_space=pltpu.MemorySpace.SMEM),   # bias scalar
            pl.BlockSpec((tm, L), lambda i: (i, 0)),             # x row tile
        ],
        out_specs=pl.BlockSpec((tm, L), lambda i: (i, 0)),
        compiler_params=pltpu.CompilerParams(
            dimension_semantics=("parallel",),   # shard rows across TCs (v7x)
            vmem_limit_bytes=32 * 1024 * 1024,   # ~8 MiB live at TM=4096; safe on all gens
        ),
        cost_estimate=cost,
    )(w_flat, b_flat, x2)


def simple_model_forward(x, w, b, *, tm_max=DEFAULT_TM):
    """y = x @ W^T + b for x:(N,1), W:(1,1), b:(1,). Returns (N,1)."""
    N, F = x.shape
    assert F == 1, "SimpleModel expects in_features == 1"
    dtype = x.dtype

    # Scalars -> f32 words (SMEM for the kernel, scalars for the XLA tail).
    w_flat = w.reshape((1,)).astype(jnp.float32)
    b_flat = b.reshape((1,)).astype(jnp.float32)

    x_flat = x.reshape(-1)            # zero-copy
    M = N // LANES
    n_main = M * LANES                # bulk handled by the kernel

    y_main = None
    if M > 0:
        # Aligned case: pure reshape (zero-copy), no pad, no trailing slice.
        x_main = x_flat if n_main == N else x_flat[:n_main]
        y_main = _linear_slab(x_main.reshape(M, LANES), w_flat, b_flat, tm_max)
        if n_main == N:
            return y_main.reshape(N, 1)

    # <= 127-element tail (or N < 128 entirely): plain XLA elementwise FMA.
    x_tail = x_flat[n_main:]
    y_tail = (x_tail.astype(jnp.float32) * w_flat[0] + b_flat[0]).astype(dtype)
    if y_main is None:
        return y_tail.reshape(N, 1)
    return jnp.concatenate([y_main.reshape(-1), y_tail]).reshape(N, 1)


if __name__ == "__main__":
    key = jax.random.PRNGKey(0)
    kw, kb, k1, k2, k3, k4 = jax.random.split(key, 6)

    # nn.Linear(1, 1) default init: U(-1/sqrt(in), 1/sqrt(in)) with in = 1.
    w = jax.random.uniform(kw, (1, 1), minval=-1.0, maxval=1.0, dtype=jnp.float32)
    b = jax.random.uniform(kb, (1,), minval=-1.0, maxval=1.0, dtype=jnp.float32)

    def ref(x):
        return x @ w.T + b

    # 1) Aligned batch (N % 128 == 0): zero-copy wrapper, 4-step parallel grid.
    N1 = 96 * 128
    x1 = jax.random.normal(k1, (N1, 1), dtype=jnp.float32)
    y1 = simple_model_forward(x1, w, b)
    jax.block_until_ready(y1)
    assert y1.shape == (N1, 1)
    assert jnp.allclose(y1, ref(x1), atol=1e-6), "mismatch (aligned batch)"

    # 2) Ragged batch: 8 full lane-rows through the kernel + 37-element XLA tail.
    N2 = 8 * 128 + 37
    x2 = jax.random.normal(k2, (N2, 1), dtype=jnp.float32)
    y2 = simple_model_forward(x2, w, b)
    jax.block_until_ready(y2)
    assert y2.shape == (N2, 1)
    assert jnp.allclose(y2, ref(x2), atol=1e-6), "mismatch (ragged tail)"

    # 3) Row count (70) not a multiple of the row tile (16): exercises the
    #    ragged last grid block (masked store) without any wrapper padding.
    N3 = 70 * 128
    x3 = jax.random.normal(k3, (N3, 1), dtype=jnp.float32)
    y3 = simple_model_forward(x3, w, b)
    jax.block_until_ready(y3)
    assert y3.shape == (N3, 1)
    assert jnp.allclose(y3, ref(x3), atol=1e-6), "mismatch (ragged last block)"

    # 4) Tiny batch (< 128): pure-XLA fallback (pallas_call setup would
    #    dominate), same math as the module.
    N4 = 8
    x4 = jax.random.normal(k4, (N4, 1), dtype=jnp.float32)
    y4 = simple_model_forward(x4, w, b)
    jax.block_until_ready(y4)
    assert y4.shape == (N4, 1)
    assert jnp.allclose(y4, ref(x4), atol=1e-6), "mismatch (tiny batch)"

    print("KERNEL_OK")
</pallas_src>

<mosaic_0001>
module attributes {stable_mosaic.version = 11 : i64} {
  func.func @linear_kernel(%arg0: i32, %arg1: memref<1xf32, #tpu.memory_space<smem>>, %arg2: memref<1xf32, #tpu.memory_space<smem>>, %arg3: memref<24x128xf32, #tpu.memory_space<vmem>>, %arg4: memref<24x128xf32, #tpu.memory_space<vmem>>) attributes {dimension_semantics = [#tpu.dimension_semantics<parallel>], iteration_bounds = array<i64: 4>, scalar_prefetch = 0 : i64, scratch_operands = 0 : i64, tpu.core_type = #tpu.core_type<tc>, window_params = [{transform_indices = @transform_0, window_bounds = array<i64: 1>}, {transform_indices = @transform_1, window_bounds = array<i64: 1>}, {transform_indices = @transform_2, window_bounds = array<i64: 24, 128>}, {transform_indices = @transform_3, window_bounds = array<i64: 24, 128>}]} {
    %c0 = arith.constant 0 : index
    %0 = memref.load %arg1[%c0] : memref<1xf32, #tpu.memory_space<smem>>
    %c0_0 = arith.constant 0 : index
    %1 = memref.load %arg2[%c0_0] : memref<1xf32, #tpu.memory_space<smem>>
    %c0_1 = arith.constant 0 : index
    %c0_2 = arith.constant 0 : index
    %2 = vector.load %arg3[%c0_1, %c0_2] : memref<24x128xf32, #tpu.memory_space<vmem>>, vector<24x128xf32>
    %3 = vector.broadcast %0 : f32 to vector<24x128xf32>
    %4 = arith.mulf %2, %3 : vector<24x128xf32>
    %5 = vector.broadcast %1 : f32 to vector<24x128xf32>
    %6 = arith.addf %4, %5 : vector<24x128xf32>
    %c0_3 = arith.constant 0 : index
    %c0_4 = arith.constant 0 : index
    %7 = vector.load %arg4[%c0_3, %c0_4] : memref<24x128xf32, #tpu.memory_space<vmem>>, vector<24x128xf32>
    tpu.vector_store %arg4[%c0_3, %c0_4], %6 {strides = array<i32>} : memref<24x128xf32, #tpu.memory_space<vmem>>, vector<24x128xf32>,
    return
  }
  func.func @transform_0(%arg0: i32) -> i32 {
    %c0_i32 = arith.constant 0 : i32
    %c0_i32_0 = arith.constant 0 : i32
    return %c0_i32 : i32
  }
  func.func @transform_1(%arg0: i32) -> i32 {
    %c0_i32 = arith.constant 0 : i32
    %c0_i32_0 = arith.constant 0 : i32
    return %c0_i32 : i32
  }
  func.func @transform_2(%arg0: i32) -> (i32, i32) {
    %c0_i32 = arith.constant 0 : i32
    %c0_i32_0 = arith.constant 0 : i32
    return %arg0, %c0_i32 : i32, i32
  }
  func.func @transform_3(%arg0: i32) -> (i32, i32) {
    %c0_i32 = arith.constant 0 : i32
    %c0_i32_0 = arith.constant 0 : i32
    return %arg0, %c0_i32 : i32, i32
  }
}

</mosaic_0001>

<llo_original>
// kernel: tpu_custom_call.1
$region0: #{tpu_custom_call.1}
  #allocation0 [shape = 'u32[]', space=smem, size = 0x4, offset = 0x4, fixed_abs, tag = 'smem constant byte address 0x4 - core index']
  #allocation1 [shape = 'u32[144,128]{1,0:T(1,128)}', space=vmem, size = 0x12000, scoped, tag = 'internal scratch']
  #allocation2 [shape = 'f32[1]{0:T(128)S(6)}', space=smem, size = 0x200, scoped, tag = 'scoped memory for tpu_custom_call.1']
  #allocation3 [shape = 'f32[1]{0:T(128)S(6)}', space=smem, size = 0x200, scoped, tag = 'scoped memory for tpu_custom_call.1']
  %s0 = inlined_call_operand.<no memory space> [shape: f32[1], index: 0, kind: input, shape index: {}]
  %s1 = inlined_call_operand.<no memory space> [shape: f32[1], index: 1, kind: input, shape index: {}]
  %s2 = inlined_call_operand.hbm [shape: f32[96,128], index: 2, kind: input, shape index: {}]
  %s3 = inlined_call_operand.hbm [shape: f32[96,128], index: 3, kind: output, shape index: {}]
  %s4 = sld [smem:[#allocation0]]
  $region49: #{tpu_custom_call.1} parent=0
    _
  %s6 = ssub.s32 1, %s4
  %s7 = scalar_select 0, %s6, %s4
  %8 = sst [smem:[#allocation2]] %s0
  %9 = sst [smem:[#allocation3]] %s1
  $region1: #{tpu_custom_call.1} parent=0
    #allocation4 [shape = 'u8[24576]{0}', space=vmem, size = 0x6000, scoped, tag = 'input window, operand 2']
    #allocation5 [shape = 's32[2]{0}', space=sflag, size = 0x8, scoped, tag = 'scoped memory for tpu_custom_call.1']
    #allocation6 [shape = 's32[2]{0}', space=sflag, size = 0x8, scoped, tag = 'scoped memory for tpu_custom_call.1']
    #allocation7 [shape = 'u8[24576]{0}', space=vmem, size = 0x6000, scoped, tag = 'output window, operand 0']
    %10 = vsyncpa [#allocation5], 0
    %s11 = scalar_lea.sflag [#allocation5], 1
    %12 = vsyncpa %s11, 0
    %13 = vsyncpa [#allocation6], 0
    %s14 = scalar_lea.sflag [#allocation6], 1
    %15 = vsyncpa %s14, 0
    loop: start=0, step=1, limit=6
    $region2: #{tpu_custom_call.1} parent=1 // loop_pre_header
      _
    $region3: #{tpu_custom_call.1} parent=1 // loop_header
      %s17 = sphi 0, %s21
      %p18 = scmp.ge.s32.totalorder %s17, 6
      %s25 = sphi 0, %s25
      %s27 = sphi 0, %s25
      %s28 = sphi 0, %s27
      %s42 = sphi 0, %s28
      %s46 = sphi 0, %s46
      %s48 = sphi 0, %s46
      %s49 = sphi 0, %s48
      %s63 = sphi 0, %s49
      %s69 = sphi 0, %s71
      %s72 = sphi 0, %s69
      %s73 = sphi 0, %s72
      %s89 = sphi 0, %s73
      %s95 = sphi 0, %s97
      %s98 = sphi 0, %s95
      %s99 = sphi 0, %s98
      %s115 = sphi 0, %s99
    $region4: #{tpu_custom_call.1} parent=1 // loop_header_branch
      %20 = sbr.rel (%p18) target = $region8
    $region5: #{tpu_custom_call.1} parent=1 // loop_body
      %s22 = ssub.s32 %s17, 1
      %s23 = ssub.s32 %s17, 2
      %s24 = sadd.s32 %s17, 1
      %s26 = sadd.s32 %s25, 1
      %p29 = scmp.eq.s32.totalorder %s17, 3
      %p30 = scmp.ne.s32.totalorder %s25, %s27
      %p31 = scmp.eq.s32.totalorder %s17, 0
      %p32 = por %p30, %p31
      %p33 = scmp.ne.s32.totalorder %s25, %s27
      %p34 = scmp.eq.s32.totalorder %s22, 3
      %p35 = por %p33, %p34
      %p36 = scmp.ne.s32.totalorder %s27, %s28
      %p37 = scmp.eq.s32.totalorder %s22, 0
      %p38 = por %p36, %p37
      %p39 = scmp.ne.s32.totalorder %s27, %s28
      %p40 = scmp.eq.s32.totalorder %s23, 3
      %p41 = por %p39, %p40
      %p43 = scmp.ne.s32.totalorder %s28, %s42
      %p44 = scmp.eq.s32.totalorder %s23, 0
      %p45 = por %p43, %p44
      %s47 = sadd.s32 %s46, 1
      %p50 = scmp.eq.s32.totalorder %s17, 3
      %p51 = scmp.ne.s32.totalorder %s46, %s48
      %p52 = scmp.eq.s32.totalorder %s17, 0
      %p53 = por %p51, %p52
      %p54 = scmp.ne.s32.totalorder %s46, %s48
      %p55 = scmp.eq.s32.totalorder %s22, 3
      %p56 = por %p54, %p55
      %p57 = scmp.ne.s32.totalorder %s48, %s49
      %p58 = scmp.eq.s32.totalorder %s22, 0
      %p59 = por %p57, %p58
      %p60 = scmp.ne.s32.totalorder %s48, %s49
      %p61 = scmp.eq.s32.totalorder %s23, 3
      %p62 = por %p60, %p61
      %p64 = scmp.ne.s32.totalorder %s49, %s63
      %p65 = scmp.eq.s32.totalorder %s23, 0
      %p66 = por %p64, %p65
      %s67 = ssub.s32 %s17, %s24
      %p68 = scmp.eq.s32.totalorder %s67, 0
      %s70 = sadd.s32 %s69, 1
      %s71 = scalar_select %p68, %s69, %s70
      %p74 = pneg %p68
      %p75 = scmp.eq.s32.totalorder %s17, 3
      %p76 = por %p74, %p75
      %p77 = scmp.ne.s32.totalorder %s69, %s72
      %p78 = scmp.eq.s32.totalorder %s17, 0
      %p79 = por %p77, %p78
      %p80 = scmp.ne.s32.totalorder %s69, %s72
      %p81 = scmp.eq.s32.totalorder %s22, 3
      %p82 = por %p80, %p81
      %p83 = scmp.ne.s32.totalorder %s72, %s73
      %p84 = scmp.eq.s32.totalorder %s22, 0
      %p85 = por %p83, %p84
      %p86 = scmp.ne.s32.totalorder %s72, %s73
      %p87 = scmp.eq.s32.totalorder %s23, 3
      %p88 = por %p86, %p87
      %p90 = scmp.ne.s32.totalorder %s73, %s89
      %p91 = scmp.eq.s32.totalorder %s23, 0
      %p92 = por %p90, %p91
      %s93 = ssub.s32 %s17, %s24
      %p94 = scmp.eq.s32.totalorder %s93, 0
      %s96 = sadd.s32 %s95, 1
      %s97 = scalar_select %p94, %s95, %s96
      %p100 = pneg %p94
      %p101 = scmp.eq.s32.totalorder %s17, 3
      %p102 = por %p100, %p101
      %p103 = scmp.ne.s32.totalorder %s95, %s98
      %p104 = scmp.eq.s32.totalorder %s17, 0
      %p105 = por %p103, %p104
      %p106 = scmp.ne.s32.totalorder %s95, %s98
      %p107 = scmp.eq.s32.totalorder %s22, 3
      %p108 = por %p106, %p107
      %p109 = scmp.ne.s32.totalorder %s98, %s99
      %p110 = scmp.eq.s32.totalorder %s22, 0
      %p111 = por %p109, %p110
      %p112 = scmp.ne.s32.totalorder %s98, %s99
      %p113 = scmp.eq.s32.totalorder %s23, 3
      %p114 = por %p112, %p113
      %p116 = scmp.ne.s32.totalorder %s99, %s115
      %p117 = scmp.eq.s32.totalorder %s23, 0
      %p118 = por %p116, %p117
      %p119 = scmp.le.s32.totalorder 1, %s17
      %p120 = scmp.lt.s32.totalorder %s17, 5
      %p121 = pnand %p119, %p120
      %p122 = pneg %p121
      // Predicated region
      $region9: #{tpu_custom_call.1} parent=5 // pred_check
        _
      $region10: #{tpu_custom_call.1} parent=5 // pred_check_branch
        %124 = sbr.rel (%p121) target = $region12
      $region11: #{tpu_custom_call.1} parent=5 // pred_region
        %s125 = ssub.s32 %s17, 1
        // Predicated region
        $region13: #{tpu_custom_call.1} parent=11 // pred_check
          %p126 = pneg %p38
        $region14: #{tpu_custom_call.1} parent=11 // pred_check_branch
          %128 = sbr.rel (%p126) target = $region16
        $region15: #{tpu_custom_call.1} parent=11 // pred_region
          _
        $region16: #{tpu_custom_call.1} parent=11 // pred_fallthru
          _
        // Predicated region
        $region17: #{tpu_custom_call.1} parent=11 // pred_check
          %p129 = pneg %p59
        $region18: #{tpu_custom_call.1} parent=11 // pred_check_branch
          %131 = sbr.rel (%p129) target = $region20
        $region19: #{tpu_custom_call.1} parent=11 // pred_region
          _
        $region20: #{tpu_custom_call.1} parent=11 // pred_fallthru
          _
      $region12: #{tpu_custom_call.1} parent=5 // pred_fallthru
        _
      %p132 = scmp.lt.s32.totalorder %s17, 4
      // Predicated region
      $region21: #{tpu_custom_call.1} parent=5 // pred_check
        %p133 = pneg %p132
      $region22: #{tpu_custom_call.1} parent=5 // pred_check_branch
        %135 = sbr.rel (%p133) target = $region24
      $region23: #{tpu_custom_call.1} parent=5 // pred_region
        // Predicated region
        $region25: #{tpu_custom_call.1} parent=23 // pred_check
          %p136 = pneg %p79
        $region26: #{tpu_custom_call.1} parent=23 // pred_check_branch
          %138 = sbr.rel (%p136) target = $region28
        $region27: #{tpu_custom_call.1} parent=23 // pred_region
          %s139 = sand.u32 %s69, 1
          %s140 = scalar_lea.sflag [#allocation5], %s139
          %s141 = sand.u32 %s69, 1
          %s142 = smul.addr %s141, 24
          %s143 = scalar_lea.vmem [#allocation4], %s142
          %s144 = smul.u32 3, %s17
          %s146 = ssub.s32 384, 384
          %147 = vsyncadd %s140, %s146
          %s148 = smul.addr %s144, 128
          %s149 = scalar_lea.hbm %s2, %s148
          %s150 = sshll.u32 %s143, 4
          %s151 = int_to_ptr.vmem [resolvable:$true] %s150
          %156 = dma.hbm_to_vmem [thread:$0]  %s149, 384, %s151, %s140, 128, 128, 8
        $region28: #{tpu_custom_call.1} parent=23 // pred_fallthru
          _
      $region24: #{tpu_custom_call.1} parent=5 // pred_fallthru
        _
      %p157 = scmp.le.s32.totalorder 1, %s17
      %p158 = scmp.lt.s32.totalorder %s17, 5
      %p159 = pnand %p157, %p158
      %p160 = pneg %p159
      // Predicated region
      $region29: #{tpu_custom_call.1} parent=5 // pred_check
        _
      $region30: #{tpu_custom_call.1} parent=5 // pred_check_branch
        %162 = sbr.rel (%p159) target = $region32
      $region31: #{tpu_custom_call.1} parent=5 // pred_region
        %s163 = ssub.s32 %s17, 1
        %s164 = sand.u32 %s72, 1
        %s165 = scalar_lea.sflag [#allocation5], %s164
        %s166 = sand.u32 %s72, 1
        %s167 = smul.addr %s166, 24
        %s168 = scalar_lea.vmem [#allocation4], %s167
        // Predicated region
        $region33: #{tpu_custom_call.1} parent=31 // pred_check
          %p169 = pneg %p85
        $region34: #{tpu_custom_call.1} parent=31 // pred_check_branch
          %171 = sbr.rel (%p169) target = $region36
        $region35: #{tpu_custom_call.1} parent=31 // pred_region
          %172 = dma.done %s165, 384
        $region36: #{tpu_custom_call.1} parent=31 // pred_fallthru
          _
        %p173 = pneg %p38
        %p174 = pneg %p35
        %p175 = pneg %p59
        %p176 = pneg %p56
        %s177 = sand.u32 %s72, 1
        %s178 = scalar_lea.sflag [#allocation5], %s177
        %s179 = sand.u32 %s72, 1
        %s180 = smul.addr %s179, 24
        %s181 = scalar_lea.vmem [#allocation4], %s180
        %p182 = pneg %p85
        %p183 = pneg %p82
        %p184 = pneg %p111
        %p185 = pneg %p108
        %s186 = sand.u32 %s98, 1
        %s187 = scalar_lea.sflag [#allocation6], %s186
        %s188 = sand.u32 %s98, 1
        %s189 = smul.addr %s188, 24
        %s190 = scalar_lea.vmem [#allocation7], %s189
        %s191 = smul.u32 3, %s22
        %s192 = smul.u32 3, %s22
        %s193 = sld [smem:[#allocation2]]
        %s194 = sld [smem:[#allocation3]]
        %v195 = vld [vmem:[%s168] sm:$0xff]
        %v196 = vld [vmem:[%s168 + $0x8] sm:$0xff]
        %v197 = vld [vmem:[%s168 + $0x10] sm:$0xff]
        %v198 = vstv %s193
        %v199 = vmul.f32 %v195, %v198
        %v200 = vmul.f32 %v196, %v198
        %v201 = vmul.f32 %v197, %v198
        %v202 = vstv %s194
        %v203 = vadd.f32 %v199, %v202
        %v204 = vadd.f32 %v200, %v202
        %v205 = vadd.f32 %v201, %v202
        %206 = vst [vmem:[%s190] sm:$0xff] %v203
        %207 = vst [vmem:[%s190 + $0x8] sm:$0xff] %v204
        %208 = vst [vmem:[%s190 + $0x10] sm:$0xff] %v205
        %s209 = sand.u32 %s98, 1
        %s210 = scalar_lea.sflag [#allocation6], %s209
        %s211 = sand.u32 %s98, 1
        %s212 = smul.addr %s211, 24
        %s213 = scalar_lea.vmem [#allocation7], %s212
        // Predicated region
        $region37: #{tpu_custom_call.1} parent=31 // pred_check
          %p214 = pneg %p108
        $region38: #{tpu_custom_call.1} parent=31 // pred_check_branch
          %216 = sbr.rel (%p214) target = $region40
        $region39: #{tpu_custom_call.1} parent=31 // pred_region
          %s217 = smul.u32 3, %s22
          %s219 = ssub.s32 384, 384
          %220 = vsyncadd %s210, %s219
          %s221 = smul.addr %s217, 128
          %s222 = scalar_lea.hbm %s3, %s221
          %s223 = sshll.u32 %s213, 4
          %s224 = int_to_ptr.vmem [resolvable:$true] %s223
          %229 = dma.vmem_to_hbm [thread:$0]  %s224, 384, %s222, %s210, 128, 128, 8
        $region40: #{tpu_custom_call.1} parent=31 // pred_fallthru
          _
      $region32: #{tpu_custom_call.1} parent=5 // pred_fallthru
        _
      %p230 = scmp.le.s32.totalorder 2, %s17
      // Predicated region
      $region41: #{tpu_custom_call.1} parent=5 // pred_check
        %p231 = pneg %p230
      $region42: #{tpu_custom_call.1} parent=5 // pred_check_branch
        %233 = sbr.rel (%p231) target = $region44
      $region43: #{tpu_custom_call.1} parent=5 // pred_region
        %s234 = ssub.s32 %s17, 2
        // Predicated region
        $region45: #{tpu_custom_call.1} parent=43 // pred_check
          %p235 = pneg %p114
        $region46: #{tpu_custom_call.1} parent=43 // pred_check_branch
          %237 = sbr.rel (%p235) target = $region48
        $region47: #{tpu_custom_call.1} parent=43 // pred_region
          %s238 = sand.u32 %s99, 1
          %s239 = scalar_lea.sflag [#allocation6], %s238
          %s240 = sand.u32 %s99, 1
          %s241 = smul.addr %s240, 24
          %s242 = scalar_lea.vmem [#allocation7], %s241
          %243 = dma.done %s239, 384
        $region48: #{tpu_custom_call.1} parent=43 // pred_fallthru
          _
      $region44: #{tpu_custom_call.1} parent=5 // pred_fallthru
        _
    $region6: #{tpu_custom_call.1} parent=1 // loop_footer
      %s21 = sadd.s32 1, %s17
    $region7: #{tpu_custom_call.1} parent=1 // loop_footer_branch
      %16 = sbr.rel target = $region3
    $region8: #{tpu_custom_call.1} parent=1 // loop_exit
      _
    %244 = vsyncpa [#allocation5], 1
    %s245 = scalar_lea.sflag [#allocation5], 1
    %246 = vsyncpa %s245, 1
    %247 = vsyncpa [#allocation6], 1
    %s248 = scalar_lea.sflag [#allocation6], 1
    %249 = vsyncpa %s248, 1

</llo_original>
